<compile_context>
chip_gen: v6e
topology: v6e:2x2x1
jax: 0.10.0
libtpu: 0.0.40
codegen_flags: <defaults>
</compile_context>

<pallas_src>
import functools

import jax
import jax.numpy as jnp
from jax.experimental import pallas as pl
from jax.experimental.pallas import tpu as pltpu


# Block / VMEM budgets (bytes). 2x(in) + 2x(out) pipeline buffers at the max
# block size is ~24 MiB, well under the explicit 48 MiB scoped-VMEM limit,
# which itself leaves headroom on every generation (v7x physical = 64 MiB).
_MAX_BLOCK_BYTES = 6 * 1024 * 1024
_VMEM_LIMIT_BYTES = 48 * 1024 * 1024


def _cdiv(a, b):
    return -(-a // b)


def _round_up(x, m):
    return _cdiv(x, m) * m


def _normalize_kernel(mean_ref, inv_sd_ref, x_ref, o_ref, *, row_tile):
    """o = (x - mean_row) * inv_sd_row, broadcast across the lane axis.

    mean_ref / inv_sd_ref: full (n_rows_pad, 1) f32 stats, resident in VMEM.
    x_ref / o_ref:         (row_tile, col_tile) tile of the flattened images.
    """
    if row_tile % 8 == 0:
        r0 = pl.multiple_of(pl.program_id(0) * row_tile, 8)
        m = mean_ref[pl.ds(r0, row_tile), :]
        s = inv_sd_ref[pl.ds(r0, row_tile), :]
    else:
        # row_tile not a multiple of 8 only happens when it equals the full
        # row count (single row block) -> static slice.
        m = mean_ref[0:row_tile, :]
        s = inv_sd_ref[0:row_tile, :]

    # o_ref.dtype == result_type(x, f32): no casts at all for f32 inputs,
    # faithful torch-style promotion for bf16/f16 inputs.
    x = x_ref[...].astype(o_ref.dtype)
    o_ref[...] = (x - m.astype(o_ref.dtype)) * s.astype(o_ref.dtype)


def _pick_tiles(n_rows, n_cols, itemsize, max_block_bytes):
    """Byte-bounded (row, col) tiles: rows in multiples of 8, cols of 128."""
    # Column tile: full width if an 8-row strip fits the budget, otherwise a
    # multiple of 128 (keeps lane-dense, unmasked vector stores). This bounds
    # the block by bytes even for very large H*W (critical on v7x's 64 MiB).
    if 8 * n_cols * itemsize <= max_block_bytes or n_cols <= 128:
        col_tile = n_cols
    else:
        col_tile = max(128, (max_block_bytes // (8 * itemsize)) // 128 * 128)
        col_tile = min(col_tile, (n_cols // 128) * 128)
    n_col_blocks = _cdiv(n_cols, col_tile)

    # Row tile: largest multiple of 8 keeping one block under the budget.
    max_row_tile = max(8, (max_block_bytes // (col_tile * itemsize)) // 8 * 8)
    if n_rows <= 8:
        row_tile = n_rows
    else:
        n_row_blocks = _cdiv(n_rows, max_row_tile)
        if n_col_blocks == 1:
            # v7x megacore: keep >= 2 grid steps (and an even count when it is
            # cheap) so "parallel" sharding feeds both TensorCores.
            if n_row_blocks == 1 and n_rows >= 16:
                n_row_blocks = 2
            elif 1 < n_row_blocks <= 8 and n_row_blocks % 2 == 1:
                n_row_blocks += 1
        row_tile = min(max_row_tile, _round_up(_cdiv(n_rows, n_row_blocks), 8))
        if row_tile >= n_rows:
            row_tile = n_rows

    # Tiny inputs that land on a single grid step: split columns instead so the
    # second TensorCore is not idle (128-lane granularity keeps dense stores).
    if (_cdiv(n_rows, row_tile) * _cdiv(n_cols, col_tile) == 1
            and n_rows < 16 and n_cols >= 256):
        col_tile = _round_up(_cdiv(n_cols, 2), 128)

    return row_tile, col_tile


def normalize_layer(x: jax.Array, means: jax.Array, sds: jax.Array,
                    *, max_block_bytes: int = _MAX_BLOCK_BYTES) -> jax.Array:
    """(x - means[c]) / sds[c] broadcast over N, H, W.  x is NCHW."""
    b, c, h, w = x.shape
    n_rows, n_cols = b * c, h * w
    # TODO(synk): if H*W is not a multiple of 128 (e.g. 7x7 / 14x14 feature
    # maps) the output stores are masked (vst.msk); padding the flattened
    # column dim in the wrapper would trade an extra HBM copy for dense stores.

    # Match torch promotion: stats are float32, so bf16/f16 inputs promote.
    out_dtype = jnp.result_type(x.dtype, jnp.float32)

    # float32 stats; precompute the reciprocal so there is no per-tile divide.
    means_f32 = jnp.asarray(means, dtype=jnp.float32)
    inv_sds_f32 = 1.0 / jnp.asarray(sds, dtype=jnp.float32)
    # TODO(synk): like the PyTorch module, there is no guard against sds == 0.

    row_tile, col_tile = _pick_tiles(n_rows, n_cols, x.dtype.itemsize,
                                     max_block_bytes)
    grid_r = _cdiv(n_rows, row_tile)
    grid_c = _cdiv(n_cols, col_tile)

    # Per-row stats of the flattened (B*C, H*W) view (row r -> channel r % C),
    # padded (mean=0, inv_sd=1) so the in-kernel dynamic slice of the last row
    # block stays in bounds and padded rows never see inf/nan stats.
    n_rows_pad = grid_r * row_tile
    mean_rows = jnp.broadcast_to(means_f32[None, :], (b, c)).reshape(n_rows, 1)
    inv_sd_rows = jnp.broadcast_to(inv_sds_f32[None, :], (b, c)).reshape(n_rows, 1)
    if n_rows_pad > n_rows:
        pad = ((0, n_rows_pad - n_rows), (0, 0))
        mean_rows = jnp.pad(mean_rows, pad)
        inv_sd_rows = jnp.pad(inv_sd_rows, pad, constant_values=1.0)

    x2d = x.reshape(n_rows, n_cols)

    out2d = pl.pallas_call(
        functools.partial(_normalize_kernel, row_tile=row_tile),
        out_shape=jax.ShapeDtypeStruct((n_rows, n_cols), out_dtype),
        grid=(grid_r, grid_c),
        in_specs=[
            # Stats are loaded into VMEM once (constant index_map) and sliced
            # per row block inside the kernel.
            pl.BlockSpec((n_rows_pad, 1), lambda i, j: (0, 0)),
            pl.BlockSpec((n_rows_pad, 1), lambda i, j: (0, 0)),
            pl.BlockSpec((row_tile, col_tile), lambda i, j: (i, j)),
        ],
        out_specs=pl.BlockSpec((row_tile, col_tile), lambda i, j: (i, j)),
        compiler_params=pltpu.CompilerParams(
            dimension_semantics=("parallel", "parallel"),
            vmem_limit_bytes=_VMEM_LIMIT_BYTES,
        ),
    )(mean_rows, inv_sd_rows, x2d)

    return out2d.reshape(b, c, h, w)


if __name__ == "__main__":
    key = jax.random.PRNGKey(0)

    # Small shapes consistent with the module's forward: (batch, C, H, W).
    B, C, H, W = 2, 4, 16, 16
    x = jax.random.normal(key, (B, C, H, W), dtype=jnp.float32)

    # Deterministic per-channel means / sds (module __init__ takes float lists).
    means = jnp.array([0.485, 0.456, 0.406, 0.5], dtype=jnp.float32)
    sds = jnp.array([0.229, 0.224, 0.225, 0.25], dtype=jnp.float32)

    out = normalize_layer(x, means, sds)
    out = jax.block_until_ready(out)

    # Reference check in plain JAX.
    ref = (x - means[None, :, None, None]) / sds[None, :, None, None]
    assert out.shape == x.shape
    assert out.dtype == ref.dtype
    assert jnp.allclose(out, ref, atol=1e-5, rtol=1e-5)

    print("KERNEL_OK")
</pallas_src>

<mosaic_0001>
module attributes {stable_mosaic.version = 11 : i64} {
  func.func @_normalize_kernel(%arg0: i32, %arg1: i32, %arg2: memref<8x1xf32, #tpu.memory_space<vmem>>, %arg3: memref<8x1xf32, #tpu.memory_space<vmem>>, %arg4: memref<8x128xf32, #tpu.memory_space<vmem>>, %arg5: memref<8x128xf32, #tpu.memory_space<vmem>>) attributes {dimension_semantics = [#tpu.dimension_semantics<parallel>, #tpu.dimension_semantics<parallel>], iteration_bounds = array<i64: 1, 2>, scalar_prefetch = 0 : i64, scratch_operands = 0 : i64, tpu.core_type = #tpu.core_type<tc>, window_params = [{pipeline_mode = #tpu.pipeline_mode<synchronous>, transform_indices = @transform_0, window_bounds = array<i64: 8, 1>}, {pipeline_mode = #tpu.pipeline_mode<synchronous>, transform_indices = @transform_1, window_bounds = array<i64: 8, 1>}, {transform_indices = @transform_2, window_bounds = array<i64: 8, 128>}, {transform_indices = @transform_3, window_bounds = array<i64: 8, 128>}]} {
    %c8_i32 = arith.constant 8 : i32
    %0 = arith.muli %arg0, %c8_i32 : i32
    %1 = tpu.assume_multiple %0, 8 : i32
    %2 = arith.index_cast %1 : i32 to index
    %c0 = arith.constant 0 : index
    %3 = vector.load %arg2[%2, %c0] : memref<8x1xf32, #tpu.memory_space<vmem>>, vector<8x1xf32>
    %4 = arith.index_cast %1 : i32 to index
    %c0_0 = arith.constant 0 : index
    %5 = vector.load %arg3[%4, %c0_0] : memref<8x1xf32, #tpu.memory_space<vmem>>, vector<8x1xf32>
    %c0_1 = arith.constant 0 : index
    %c0_2 = arith.constant 0 : index
    %6 = vector.load %arg4[%c0_1, %c0_2] : memref<8x128xf32, #tpu.memory_space<vmem>>, vector<8x128xf32>
    %7 = vector.broadcast %3 : vector<8x1xf32> to vector<8x128xf32>
    %8 = arith.subf %6, %7 : vector<8x128xf32>
    %9 = vector.broadcast %5 : vector<8x1xf32> to vector<8x128xf32>
    %10 = arith.mulf %8, %9 : vector<8x128xf32>
    %c0_3 = arith.constant 0 : index
    %c0_4 = arith.constant 0 : index
    %11 = vector.load %arg5[%c0_3, %c0_4] : memref<8x128xf32, #tpu.memory_space<vmem>>, vector<8x128xf32>
    tpu.vector_store %arg5[%c0_3, %c0_4], %10 {strides = array<i32>} : memref<8x128xf32, #tpu.memory_space<vmem>>, vector<8x128xf32>,
    return
  }
  func.func @transform_0(%arg0: i32, %arg1: i32) -> (i32, i32) {
    %c0_i32 = arith.constant 0 : i32
    %c0_i32_0 = arith.constant 0 : i32
    %c0_i32_1 = arith.constant 0 : i32
    return %c0_i32, %c0_i32_0 : i32, i32
  }
  func.func @transform_1(%arg0: i32, %arg1: i32) -> (i32, i32) {
    %c0_i32 = arith.constant 0 : i32
    %c0_i32_0 = arith.constant 0 : i32
    %c0_i32_1 = arith.constant 0 : i32
    return %c0_i32, %c0_i32_0 : i32, i32
  }
  func.func @transform_2(%arg0: i32, %arg1: i32) -> (i32, i32) {
    %c0_i32 = arith.constant 0 : i32
    return %arg0, %arg1 : i32, i32
  }
  func.func @transform_3(%arg0: i32, %arg1: i32) -> (i32, i32) {
    %c0_i32 = arith.constant 0 : i32
    return %arg0, %arg1 : i32, i32
  }
}

</mosaic_0001>

<llo_original>
// kernel: tpu_custom_call.1
$region0: #{tpu_custom_call.1}
  #allocation0 [shape = 'u32[]', space=smem, size = 0x4, offset = 0x4, fixed_abs, tag = 'smem constant byte address 0x4 - core index']
  #allocation1 [shape = 'u32[144,128]{1,0:T(1,128)}', space=vmem, size = 0x12000, scoped, tag = 'internal scratch']
  %s0 = inlined_call_operand.vmem [shape: f32[8,1], index: 0, kind: input, shape index: {}]
  %s1 = inlined_call_operand.vmem [shape: f32[8,1], index: 1, kind: input, shape index: {}]
  %s2 = inlined_call_operand.vmem [shape: f32[8,256], index: 2, kind: input, shape index: {}]
  %s3 = inlined_call_operand.hbm [shape: f32[8,256], index: 3, kind: output, shape index: {}]
  %s4 = sld [smem:[#allocation0]]
  $region45: #{tpu_custom_call.1} parent=0
    _
  %s6 = ssub.s32 1, %s4
  %s7 = scalar_select 0, %s6, %s4
  $region1: #{tpu_custom_call.1} parent=0
    #allocation2 [shape = 'u8[8192]{0}', space=vmem, size = 0x2000, scoped, tag = 'output window, operand 0']
    #allocation3 [shape = 's32[2]{0}', space=sflag, size = 0x8, scoped, tag = 'scoped memory for tpu_custom_call.1']
    %8 = vsyncpa [#allocation3], 0
    %s9 = scalar_lea.sflag [#allocation3], 1
    %10 = vsyncpa %s9, 0
    loop: start=0, step=1, limit=4
    $region2: #{tpu_custom_call.1} parent=1 // loop_pre_header
      _
    $region3: #{tpu_custom_call.1} parent=1 // loop_header
      %s12 = sphi 0, %s16
      %p13 = scmp.ge.s32.totalorder %s12, 4
      %s19 = sphi 0, %s31
      %s20 = sphi 0, %s27
      %s21 = sphi 0, %s19
      %s22 = sphi 0, %s20
      %s23 = sphi 0, %s21
      %s24 = sphi 0, %s22
      %s32 = sphi 0, %s32
      %s34 = sphi 0, %s32
      %s35 = sphi 0, %s34
      %s49 = sphi 0, %s35
      %s53 = sphi 0, %s53
      %s55 = sphi 0, %s53
      %s56 = sphi 0, %s55
      %s70 = sphi 0, %s56
      %s78 = sphi 0, %s80
      %s81 = sphi 0, %s78
      %s82 = sphi 0, %s81
      %s98 = sphi 0, %s82
      %s106 = sphi 0, %s108
      %s109 = sphi 0, %s106
      %s110 = sphi 0, %s109
      %s126 = sphi 0, %s110
    $region4: #{tpu_custom_call.1} parent=1 // loop_header_branch
      %15 = sbr.rel (%p13) target = $region8
    $region5: #{tpu_custom_call.1} parent=1 // loop_body
      %s17 = ssub.s32 %s12, 1
      %s18 = ssub.s32 %s12, 2
      %s25 = sadd.s32 1, %s20
      %p26 = scmp.ge.s32.totalorder %s25, 2
      %s27 = scalar_select %p26, 0, %s25
      %s28 = sadd.s32 1, %s19
      %s29 = scalar_select %p26, %s28, %s19
      %p30 = scmp.ge.s32.totalorder %s29, 1
      %s31 = scalar_select %p30, 0, %s29
      %s33 = sadd.s32 %s32, 1
      %p36 = scmp.eq.s32.totalorder %s12, 1
      %p37 = scmp.ne.s32.totalorder %s32, %s34
      %p38 = scmp.eq.s32.totalorder %s12, 0
      %p39 = por %p37, %p38
      %p40 = scmp.ne.s32.totalorder %s32, %s34
      %p41 = scmp.eq.s32.totalorder %s17, 1
      %p42 = por %p40, %p41
      %p43 = scmp.ne.s32.totalorder %s34, %s35
      %p44 = scmp.eq.s32.totalorder %s17, 0
      %p45 = por %p43, %p44
      %p46 = scmp.ne.s32.totalorder %s34, %s35
      %p47 = scmp.eq.s32.totalorder %s18, 1
      %p48 = por %p46, %p47
      %p50 = scmp.ne.s32.totalorder %s35, %s49
      %p51 = scmp.eq.s32.totalorder %s18, 0
      %p52 = por %p50, %p51
      %s54 = sadd.s32 %s53, 1
      %p57 = scmp.eq.s32.totalorder %s12, 1
      %p58 = scmp.ne.s32.totalorder %s53, %s55
      %p59 = scmp.eq.s32.totalorder %s12, 0
      %p60 = por %p58, %p59
      %p61 = scmp.ne.s32.totalorder %s53, %s55
      %p62 = scmp.eq.s32.totalorder %s17, 1
      %p63 = por %p61, %p62
      %p64 = scmp.ne.s32.totalorder %s55, %s56
      %p65 = scmp.eq.s32.totalorder %s17, 0
      %p66 = por %p64, %p65
      %p67 = scmp.ne.s32.totalorder %s55, %s56
      %p68 = scmp.eq.s32.totalorder %s18, 1
      %p69 = por %p67, %p68
      %p71 = scmp.ne.s32.totalorder %s56, %s70
      %p72 = scmp.eq.s32.totalorder %s18, 0
      %p73 = por %p71, %p72
      %s74 = ssub.s32 %s19, %s31
      %s75 = ssub.s32 %s20, %s27
      %s76 = sor.u32 %s74, %s75
      %p77 = scmp.eq.s32.totalorder %s76, 0
      %s79 = sadd.s32 %s78, 1
      %s80 = scalar_select %p77, %s78, %s79
      %p83 = pneg %p77
      %p84 = scmp.eq.s32.totalorder %s12, 1
      %p85 = por %p83, %p84
      %p86 = scmp.ne.s32.totalorder %s78, %s81
      %p87 = scmp.eq.s32.totalorder %s12, 0
      %p88 = por %p86, %p87
      %p89 = scmp.ne.s32.totalorder %s78, %s81
      %p90 = scmp.eq.s32.totalorder %s17, 1
      %p91 = por %p89, %p90
      %p92 = scmp.ne.s32.totalorder %s81, %s82
      %p93 = scmp.eq.s32.totalorder %s17, 0
      %p94 = por %p92, %p93
      %p95 = scmp.ne.s32.totalorder %s81, %s82
      %p96 = scmp.eq.s32.totalorder %s18, 1
      %p97 = por %p95, %p96
      %p99 = scmp.ne.s32.totalorder %s82, %s98
      %p100 = scmp.eq.s32.totalorder %s18, 0
      %p101 = por %p99, %p100
      %s102 = ssub.s32 %s19, %s31
      %s103 = ssub.s32 %s20, %s27
      %s104 = sor.u32 %s102, %s103
      %p105 = scmp.eq.s32.totalorder %s104, 0
      %s107 = sadd.s32 %s106, 1
      %s108 = scalar_select %p105, %s106, %s107
      %p111 = pneg %p105
      %p112 = scmp.eq.s32.totalorder %s12, 1
      %p113 = por %p111, %p112
      %p114 = scmp.ne.s32.totalorder %s106, %s109
      %p115 = scmp.eq.s32.totalorder %s12, 0
      %p116 = por %p114, %p115
      %p117 = scmp.ne.s32.totalorder %s106, %s109
      %p118 = scmp.eq.s32.totalorder %s17, 1
      %p119 = por %p117, %p118
      %p120 = scmp.ne.s32.totalorder %s109, %s110
      %p121 = scmp.eq.s32.totalorder %s17, 0
      %p122 = por %p120, %p121
      %p123 = scmp.ne.s32.totalorder %s109, %s110
      %p124 = scmp.eq.s32.totalorder %s18, 1
      %p125 = por %p123, %p124
      %p127 = scmp.ne.s32.totalorder %s110, %s126
      %p128 = scmp.eq.s32.totalorder %s18, 0
      %p129 = por %p127, %p128
      %p130 = scmp.le.s32.totalorder 1, %s12
      %p131 = scmp.lt.s32.totalorder %s12, 3
      %p132 = pnand %p130, %p131
      %p133 = pneg %p132
      // Predicated region
      $region9: #{tpu_custom_call.1} parent=5 // pred_check
        _
      $region10: #{tpu_custom_call.1} parent=5 // pred_check_branch
        %135 = sbr.rel (%p132) target = $region12
      $region11: #{tpu_custom_call.1} parent=5 // pred_region
        %s136 = ssub.s32 %s12, 1
        // Predicated region
        $region13: #{tpu_custom_call.1} parent=11 // pred_check
          %p137 = pneg %p45
        $region14: #{tpu_custom_call.1} parent=11 // pred_check_branch
          %139 = sbr.rel (%p137) target = $region16
        $region15: #{tpu_custom_call.1} parent=11 // pred_region
          _
        $region16: #{tpu_custom_call.1} parent=11 // pred_fallthru
          _
        // Predicated region
        $region17: #{tpu_custom_call.1} parent=11 // pred_check
          %p140 = pneg %p66
        $region18: #{tpu_custom_call.1} parent=11 // pred_check_branch
          %142 = sbr.rel (%p140) target = $region20
        $region19: #{tpu_custom_call.1} parent=11 // pred_region
          _
        $region20: #{tpu_custom_call.1} parent=11 // pred_fallthru
          _
      $region12: #{tpu_custom_call.1} parent=5 // pred_fallthru
        _
      %p143 = scmp.lt.s32.totalorder %s12, 2
      // Predicated region
      $region21: #{tpu_custom_call.1} parent=5 // pred_check
        %p144 = pneg %p143
      $region22: #{tpu_custom_call.1} parent=5 // pred_check_branch
        %146 = sbr.rel (%p144) target = $region24
      $region23: #{tpu_custom_call.1} parent=5 // pred_region
        // Predicated region
        $region25: #{tpu_custom_call.1} parent=23 // pred_check
          %p147 = pneg %p88
        $region26: #{tpu_custom_call.1} parent=23 // pred_check_branch
          %149 = sbr.rel (%p147) target = $region28
        $region27: #{tpu_custom_call.1} parent=23 // pred_region
          %p150 = scmp.lt.s32.totalorder %s19, 0
          %s151 = scalar_select %p150, %s19, 0
          %p152 = scmp.lt.s32.totalorder %s20, 1
          %s153 = scalar_select %p152, %s20, 1
          %s154 = smul.addr %s151, 2
          %s155 = sadd.s32 %s153, %s154
          %s156 = smul.addr %s155, 8
          %s157 = scalar_lea.vmem %s2, %s156
        $region28: #{tpu_custom_call.1} parent=23 // pred_fallthru
          _
      $region24: #{tpu_custom_call.1} parent=5 // pred_fallthru
        _
      %p158 = scmp.le.s32.totalorder 1, %s12
      %p159 = scmp.lt.s32.totalorder %s12, 3
      %p160 = pnand %p158, %p159
      %p161 = pneg %p160
      // Predicated region
      $region29: #{tpu_custom_call.1} parent=5 // pred_check
        _
      $region30: #{tpu_custom_call.1} parent=5 // pred_check_branch
        %163 = sbr.rel (%p160) target = $region32
      $region31: #{tpu_custom_call.1} parent=5 // pred_region
        %s164 = ssub.s32 %s12, 1
        %p165 = pneg %p45
        %p166 = pneg %p42
        %p167 = pneg %p66
        %p168 = pneg %p63
        %p169 = scmp.lt.s32.totalorder %s21, 0
        %s170 = scalar_select %p169, %s21, 0
        %p171 = scmp.lt.s32.totalorder %s22, 1
        %s172 = scalar_select %p171, %s22, 1
        %s173 = smul.addr %s170, 2
        %s174 = sadd.s32 %s172, %s173
        %s175 = smul.addr %s174, 8
        %s176 = scalar_lea.vmem %s2, %s175
        %p177 = pneg %p94
        %p178 = pneg %p91
        %p179 = pneg %p122
        %p180 = pneg %p119
        %s181 = sand.u32 %s109, 1
        %s182 = scalar_lea.sflag [#allocation3], %s181
        %s183 = sand.u32 %s109, 1
        %s184 = smul.addr %s183, 8
        %s185 = scalar_lea.vmem [#allocation2], %s184
        %p186 = scmp.lt.s32.totalorder %s21, 0
        %s187 = scalar_select %p186, %s21, 0
        %p188 = scmp.lt.s32.totalorder %s22, 1
        %s189 = scalar_select %p188, %s22, 1
        %s190 = smul.addr %s187, 2
        %s191 = sadd.s32 %s189, %s190
        %s192 = smul.addr %s191, 8
        %s193 = scalar_lea.vmem %s2, %s192
        %s194 = smul.u32 %s21, 8
        %s195 = scalar_lea.vmem %s0, %s194
        %v196 = vld [vmem:[%s195] sm:$0xff]
        %s197 = scalar_lea.vmem %s1, %s194
        %v198 = vld [vmem:[%s197] sm:$0xff]
        %v199 = vld [vmem:[%s193] sm:$0xff]
        %201 = vset.pattern.permute.xlu0 0
        %202 = vperm.xlu0 %201, %v196
        %v203 = vpop.permute.xlu0 %202
        %v205 = vsub.f32 %v199, %v203
        %207 = vset.pattern.permute.xlu0 0
        %208 = vperm.xlu0 %207, %v198
        %v209 = vpop.permute.xlu0 %208
        %v211 = vmul.f32 %v205, %v209
        %212 = vst [vmem:[%s185] sm:$0xff] %v211
        %s213 = sand.u32 %s109, 1
        %s214 = scalar_lea.sflag [#allocation3], %s213
        %s215 = sand.u32 %s109, 1
        %s216 = smul.addr %s215, 8
        %s217 = scalar_lea.vmem [#allocation2], %s216
        // Predicated region
        $region33: #{tpu_custom_call.1} parent=31 // pred_check
          %p218 = pneg %p119
        $region34: #{tpu_custom_call.1} parent=31 // pred_check_branch
          %220 = sbr.rel (%p218) target = $region36
        $region35: #{tpu_custom_call.1} parent=31 // pred_region
          %s222 = ssub.s32 128, 128
          %223 = vsyncadd %s214, %s222
          %s224 = smul.addr %s21, 2
          %s225 = sadd.s32 %s22, %s224
          %s226 = smul.addr %s225, 128
          %s227 = scalar_lea.hbm %s3, %s226
          %s229 = sshll.u32 %s217, 4
          %s230 = int_to_ptr.vmem [resolvable:$true] %s229
          %232 = dma.vmem_to_hbm [thread:$0]  %s230, 128, %s227, %s214
        $region36: #{tpu_custom_call.1} parent=31 // pred_fallthru
          _
      $region32: #{tpu_custom_call.1} parent=5 // pred_fallthru
        _
      %p233 = scmp.le.s32.totalorder 2, %s12
      // Predicated region
      $region37: #{tpu_custom_call.1} parent=5 // pred_check
        %p234 = pneg %p233
      $region38: #{tpu_custom_call.1} parent=5 // pred_check_branch
        %236 = sbr.rel (%p234) target = $region40
      $region39: #{tpu_custom_call.1} parent=5 // pred_region
        %s237 = ssub.s32 %s12, 2
        // Predicated region
        $region41: #{tpu_custom_call.1} parent=39 // pred_check
          %p238 = pneg %p125
        $region42: #{tpu_custom_call.1} parent=39 // pred_check_branch
          %240 = sbr.rel (%p238) target = $region44
        $region43: #{tpu_custom_call.1} parent=39 // pred_region
          %s241 = sand.u32 %s110, 1
          %s242 = scalar_lea.sflag [#allocation3], %s241
          %s243 = sand.u32 %s110, 1
          %s244 = smul.addr %s243, 8
          %s245 = scalar_lea.vmem [#allocation2], %s244
          %246 = dma.done %s242, 128
        $region44: #{tpu_custom_call.1} parent=39 // pred_fallthru
          _
      $region40: #{tpu_custom_call.1} parent=5 // pred_fallthru
        _
    $region6: #{tpu_custom_call.1} parent=1 // loop_footer
      %s16 = sadd.s32 1, %s12
    $region7: #{tpu_custom_call.1} parent=1 // loop_footer_branch
      %11 = sbr.rel target = $region3
    $region8: #{tpu_custom_call.1} parent=1 // loop_exit
      _
    %247 = vsyncpa [#allocation3], 1
    %s248 = scalar_lea.sflag [#allocation3], 1
    %249 = vsyncpa %s248, 1

</llo_original>
